<compile_context>
chip_gen: v7x
topology: tpu7x:2x2x1
jax: 0.10.0
libtpu: 0.0.40
codegen_flags: <defaults>
</compile_context>

<pallas_src>
import math

import jax
import jax.numpy as jnp
from jax.experimental import pallas as pl
from jax.experimental.pallas import tpu as pltpu

_LANE = 128
_SUBLANE = 8
# ~2 MiB per in/out block -> ~8 MiB double-buffered pipeline footprint,
# safe on v5e (16 MiB scoped default), v6e and v7x.
_TARGET_BLOCK_BYTES = 2 * 1024 * 1024


def _drop_path_kernel(x_ref, m_ref, o_ref):
    # x_ref: (b_tile, tile_f); m_ref: (b_tile, 1) per-sample scale with
    # 1/keep_prob already folded in.  One multiply, broadcast along lanes.
    o_ref[...] = x_ref[...] * m_ref[...]


def _choose_tiles(B, F, itemsize):
    """Pick (b_tile, tile_f) obeying the (8,128)/full-dim rule, ~2 MiB blocks."""
    total_bytes = B * F * itemsize
    if total_bytes <= _TARGET_BLOCK_BYTES:
        # Tiny-input fast path: one grid step over the whole array.
        return B, F
    row_bytes = F * itemsize
    b_min = B if B < _SUBLANE else _SUBLANE  # == full dim, or a multiple of 8
    if row_bytes * b_min > _TARGET_BLOCK_BYTES:
        # Rows are large: block along the feature dim in lane multiples;
        # the trailing partial F-tile is masked by Pallas (no padding).
        tile_f = max(
            _LANE,
            (_TARGET_BLOCK_BYTES // (b_min * itemsize)) // _LANE * _LANE,
        )
        return b_min, min(tile_f, F)
    # Rows are small: keep full (contiguous) rows and span multiple samples.
    # (This branch implies B >= 8, so b_tile below is a multiple of 8.)
    rows_per_block = max(_SUBLANE, _TARGET_BLOCK_BYTES // row_bytes)
    b_tile = min(B, (rows_per_block // _SUBLANE) * _SUBLANE)
    return b_tile, F


def drop_path(x, drop_prob=0.0, training=False, *, key=None):
    """JAX/Pallas equivalent of the PyTorch drop_path function."""
    if drop_prob == 0.0 or not training:
        return x
    if key is None:
        raise ValueError(
            "drop_path: an explicit PRNG key is required when training with "
            "drop_prob > 0 (a fixed default key would reuse the same mask)."
        )

    keep_prob = 1.0 - float(drop_prob)
    if keep_prob <= 0.0:
        # Degenerate config: every sample is dropped.
        return jnp.zeros_like(x)

    B = x.shape[0]
    F = math.prod(x.shape[1:]) if x.ndim > 1 else 1

    # Per-sample Bernoulli(keep_prob) mask, same recipe as torch:
    # floor(keep_prob + U[0,1)).  Fold 1/keep_prob in here (a B-element op) so
    # the kernel does a single multiply in x.dtype.
    # NOTE: for low-precision x (e.g. bf16) this rounds the scale once, which
    # may differ from torch's x.div(keep_prob) by one rounding step.
    u = jax.random.uniform(key, (B,), dtype=jnp.float32)
    scale = (jnp.floor(keep_prob + u) * (1.0 / keep_prob)).astype(x.dtype)
    scale2 = scale.reshape(B, 1)

    # Free row-major reshape; no padding, ragged F handled by Pallas masking
    # (block last dim is a multiple of 128 or equals the full F).
    x2 = x.reshape(B, F)
    itemsize = jnp.dtype(x.dtype).itemsize
    b_tile, tile_f = _choose_tiles(B, F, itemsize)
    grid = (pl.cdiv(B, b_tile), pl.cdiv(F, tile_f))

    out2 = pl.pallas_call(
        _drop_path_kernel,
        out_shape=jax.ShapeDtypeStruct((B, F), x.dtype),
        grid=grid,
        in_specs=[
            pl.BlockSpec((b_tile, tile_f), lambda b, f: (b, f)),
            pl.BlockSpec((b_tile, 1), lambda b, f: (b, 0)),
        ],
        out_specs=pl.BlockSpec((b_tile, tile_f), lambda b, f: (b, f)),
        compiler_params=pltpu.CompilerParams(
            dimension_semantics=("parallel", "parallel"),
        ),
    )(x2, scale2)

    return out2.reshape(x.shape)


class DropPath:
    """Mirror of the PyTorch nn.Module (no parameters)."""

    def __init__(self, drop_prob=None):
        self.drop_prob = drop_prob if drop_prob is not None else 0.0
        self.training = True

    def __call__(self, x, key=None):
        return drop_path(x, self.drop_prob, self.training, key=key)


if __name__ == "__main__":
    key = jax.random.PRNGKey(0)
    k_x, k_mask, k_x2 = jax.random.split(key, 3)

    # Small NCHW-shaped input consistent with how DropPath is used in PDFormer.
    x = jax.random.normal(k_x, (2, 4, 16, 16), dtype=jnp.float32)

    drop_prob = 0.3
    keep_prob = 1.0 - drop_prob

    module = DropPath(drop_prob=drop_prob)
    module.training = True
    out = jax.block_until_ready(module(x, key=k_mask))

    # Pure-JAX reference with identical RNG recipe.
    u = jax.random.uniform(k_mask, (2,), dtype=jnp.float32)
    mask = jnp.floor(keep_prob + u).reshape(2, 1, 1, 1).astype(x.dtype)
    ref = x / keep_prob * mask
    assert out.shape == x.shape and out.dtype == x.dtype
    assert jnp.allclose(out, ref, atol=1e-6, rtol=1e-5)

    # Non-multiple-of-128 feature count exercises the ragged-F (full-dim) path.
    x2 = jax.random.normal(k_x2, (2, 3, 5, 7), dtype=jnp.float32)
    out2 = jax.block_until_ready(module(x2, key=k_mask))
    u2 = jax.random.uniform(k_mask, (2,), dtype=jnp.float32)
    mask2 = jnp.floor(keep_prob + u2).reshape(2, 1, 1, 1).astype(x2.dtype)
    ref2 = x2 / keep_prob * mask2
    assert out2.shape == x2.shape
    assert jnp.allclose(out2, ref2, atol=1e-6, rtol=1e-5)

    # Eval / drop_prob=0 paths return x unchanged (no kernel launched).
    module.training = False
    out_eval = jax.block_until_ready(module(x, key=k_mask))
    assert jnp.array_equal(out_eval, x)
    module.training = True
    module.drop_prob = 0.0
    out_p0 = jax.block_until_ready(module(x, key=k_mask))
    assert jnp.array_equal(out_p0, x)

    print("KERNEL_OK")
</pallas_src>

<mosaic_0001>
module attributes {stable_mosaic.version = 11 : i64} {
  func.func @_drop_path_kernel(%arg0: i32, %arg1: i32, %arg2: memref<2x1024xf32, #tpu.memory_space<vmem>>, %arg3: memref<2x1xf32, #tpu.memory_space<vmem>>, %arg4: memref<2x1024xf32, #tpu.memory_space<vmem>>) attributes {dimension_semantics = [#tpu.dimension_semantics<parallel>, #tpu.dimension_semantics<parallel>], iteration_bounds = array<i64: 1, 1>, scalar_prefetch = 0 : i64, scratch_operands = 0 : i64, tpu.core_type = #tpu.core_type<tc>, window_params = [{transform_indices = @transform_0, window_bounds = array<i64: 2, 1024>}, {transform_indices = @transform_1, window_bounds = array<i64: 2, 1>}, {transform_indices = @transform_2, window_bounds = array<i64: 2, 1024>}]} {
    %c0 = arith.constant 0 : index
    %c0_0 = arith.constant 0 : index
    %0 = vector.load %arg2[%c0, %c0_0] : memref<2x1024xf32, #tpu.memory_space<vmem>>, vector<2x1024xf32>
    %c0_1 = arith.constant 0 : index
    %c0_2 = arith.constant 0 : index
    %1 = vector.load %arg3[%c0_1, %c0_2] : memref<2x1xf32, #tpu.memory_space<vmem>>, vector<2x1xf32>
    %2 = vector.broadcast %1 : vector<2x1xf32> to vector<2x1024xf32>
    %3 = arith.mulf %0, %2 : vector<2x1024xf32>
    %c0_3 = arith.constant 0 : index
    %c0_4 = arith.constant 0 : index
    %4 = vector.load %arg4[%c0_3, %c0_4] : memref<2x1024xf32, #tpu.memory_space<vmem>>, vector<2x1024xf32>
    tpu.vector_store %arg4[%c0_3, %c0_4], %3 {strides = array<i32>} : memref<2x1024xf32, #tpu.memory_space<vmem>>, vector<2x1024xf32>,
    return
  }
  func.func @transform_0(%arg0: i32, %arg1: i32) -> (i32, i32) {
    %c0_i32 = arith.constant 0 : i32
    return %arg0, %arg1 : i32, i32
  }
  func.func @transform_1(%arg0: i32, %arg1: i32) -> (i32, i32) {
    %c0_i32 = arith.constant 0 : i32
    %c0_i32_0 = arith.constant 0 : i32
    return %arg0, %c0_i32 : i32, i32
  }
  func.func @transform_2(%arg0: i32, %arg1: i32) -> (i32, i32) {
    %c0_i32 = arith.constant 0 : i32
    return %arg0, %arg1 : i32, i32
  }
}

</mosaic_0001>

<llo_original>
// kernel: tpu_custom_call.1
$region0: #{tpu_custom_call.1}
  #allocation0 [shape = 'u32[]', space=smem, size = 0x4, offset = 0x4, fixed_abs, tag = 'smem constant byte address 0x4 - core index']
  #allocation1 [shape = 'u32[144,128]{1,0:T(1,128)}', space=vmem, size = 0x12000, scoped, tag = 'internal scratch']
  %s0 = inlined_call_operand.hbm [shape: f32[2,1024], index: 0, kind: input, shape index: {}]
  %s1 = inlined_call_operand.vmem [shape: f32[2,1], index: 1, kind: input, shape index: {}]
  %s2 = inlined_call_operand.hbm [shape: f32[2,1024], index: 2, kind: output, shape index: {}]
  %s3 = sld [smem:[#allocation0]]
  $region22: #{tpu_custom_call.1} parent=0
    _
  %s5 = ssub.s32 1, %s3
  %s6 = scalar_select 0, %s5, %s3
  $region1: #{tpu_custom_call.1} parent=0
    #allocation2 [shape = 'u8[8192]{0}', space=vmem, size = 0x2000, scoped, tag = 'input window, operand 0, single buffered']
    #allocation3 [shape = 's32[1]{0}', space=sflag, size = 0x4, scoped, tag = 'scoped memory for tpu_custom_call.1']
    #allocation4 [shape = 's32[1]{0}', space=sflag, size = 0x4, scoped, tag = 'scoped memory for tpu_custom_call.1']
    #allocation5 [shape = 'u8[8192]{0}', space=vmem, size = 0x2000, scoped, tag = 'output window, operand 0, single buffered']
    %7 = vsyncpa [#allocation3], 0
    %8 = vsyncpa [#allocation4], 0
    // Predicated region
    $region2: #{tpu_custom_call.1} parent=1 // pred_check
      _
    $region3: #{tpu_custom_call.1} parent=1 // pred_check_branch
      %10 = sbr.rel (0) target = $region5
    $region4: #{tpu_custom_call.1} parent=1 // pred_region
      %s12 = ssub.s32 256, 256
      %13 = vsyncadd [#allocation3], %s12
      %s15 = sshll.u32 [#allocation2], 4
      %s16 = int_to_ptr.vmem [resolvable:$true] %s15
      %18 = dma.hbm_to_vmem [thread:$0]  %s0, 256, %s16, [#allocation3]
    $region5: #{tpu_custom_call.1} parent=1 // pred_fallthru
      _
    // Predicated region
    $region6: #{tpu_custom_call.1} parent=1 // pred_check
      _
    $region7: #{tpu_custom_call.1} parent=1 // pred_check_branch
      %20 = sbr.rel (0) target = $region9
    $region8: #{tpu_custom_call.1} parent=1 // pred_region
      _
    $region9: #{tpu_custom_call.1} parent=1 // pred_fallthru
      _
    // Predicated region
    $region10: #{tpu_custom_call.1} parent=1 // pred_check
      _
    $region11: #{tpu_custom_call.1} parent=1 // pred_check_branch
      %22 = sbr.rel (0) target = $region13
    $region12: #{tpu_custom_call.1} parent=1 // pred_region
      %23 = dma.done [#allocation3], 256
    $region13: #{tpu_custom_call.1} parent=1 // pred_fallthru
      _
    %v24 = vld [vmem:[#allocation2] sm:$0xff]
    %v25 = vld [vmem:[#allocation2 + $0x8] sm:$0xff]
    %v26 = vld [vmem:[%s1] sm:$0x3]
    %28 = vset.pattern.permute.xlu0 0
    %29 = vperm.xlu0 %28, %v26
    %v30 = vpop.permute.xlu0 %29
    %v32 = vunpack.c.l.s4 269488144
    %v33 = vunpack.c.0.s8 %v32
    %v34 = vlaneseq
    %v35 = vshrl.u32 %v34, 7
    %v36 = vsub.s32 %v33, %v35
    %v37 = vrot.slane %v30, %v36
    %v39 = vmul.f32 %v24, %v37
    %v40 = vmul.f32 %v25, %v37
    %41 = vst [vmem:[#allocation5] sm:$0xff] %v39
    %42 = vst [vmem:[#allocation5 + $0x8] sm:$0xff] %v40
    // Predicated region
    $region14: #{tpu_custom_call.1} parent=1 // pred_check
      _
    $region15: #{tpu_custom_call.1} parent=1 // pred_check_branch
      %44 = sbr.rel (0) target = $region17
    $region16: #{tpu_custom_call.1} parent=1 // pred_region
      %s46 = ssub.s32 256, 256
      %47 = vsyncadd [#allocation4], %s46
      %s49 = sshll.u32 [#allocation5], 4
      %s50 = int_to_ptr.vmem [resolvable:$true] %s49
      %52 = dma.vmem_to_hbm [thread:$0]  %s50, 256, %s2, [#allocation4]
    $region17: #{tpu_custom_call.1} parent=1 // pred_fallthru
      _
    // Predicated region
    $region18: #{tpu_custom_call.1} parent=1 // pred_check
      _
    $region19: #{tpu_custom_call.1} parent=1 // pred_check_branch
      %54 = sbr.rel (0) target = $region21
    $region20: #{tpu_custom_call.1} parent=1 // pred_region
      %55 = dma.done [#allocation4], 256
    $region21: #{tpu_custom_call.1} parent=1 // pred_fallthru
      _
    %56 = vsyncpa [#allocation3], 1
    %57 = vsyncpa [#allocation4], 1

</llo_original>
